<compile_context>
chip_gen: v7x
topology: tpu7x:2x2x1
jax: 0.10.0
libtpu: 0.0.40
codegen_flags: <defaults>
</compile_context>

<pallas_src>
import functools

import numpy as np
import jax
import jax.numpy as jnp
from jax.experimental import pallas as pl
from jax.experimental.pallas import tpu as pltpu


def _ru(x, m):
    return ((x + m - 1) // m) * m


# --------------------------------------------------------------------------
# tile selection helpers (minimize padding, keep tiles VMEM-friendly)
# --------------------------------------------------------------------------
def _pick_m_tile(M):
    Mp = _ru(M, 8)
    if Mp <= 512:
        return Mp, Mp
    for t in (512, 256, 128):
        if Mp % t == 0:
            return t, Mp
    return 256, _ru(M, 256)


def _pick_k_tile(K):
    Kp = _ru(K, 128)
    if Kp <= 512:
        return Kp, Kp
    for t in (512, 384, 256, 128):
        if Kp % t == 0:
            return t, Kp
    return 128, Kp


def _pick_n_tile(N):
    Np = _ru(N, 128)
    if Np <= 256:
        return Np, Np
    return (256, Np) if Np % 256 == 0 else (128, Np)


# --------------------------------------------------------------------------
# Pallas GEMM (bf16 operands, f32 accumulation in the resident output block)
# --------------------------------------------------------------------------
def _matmul_kernel(a_ref, b_ref, o_ref):
    @pl.when(pl.program_id(2) == 0)
    def _():
        o_ref[...] = jnp.zeros_like(o_ref)

    o_ref[...] += jnp.dot(a_ref[...], b_ref[...],
                          preferred_element_type=jnp.float32)


def pallas_matmul(a, b):
    """(M, K) @ (K, N) -> f32, operands cast to bf16 for the MXU."""
    M, K = a.shape
    K2, N = b.shape
    assert K == K2
    tm, Mp = _pick_m_tile(M)
    tk, Kp = _pick_k_tile(K)
    tn, Np = _pick_n_tile(N)

    a = a.astype(jnp.bfloat16)
    b = b.astype(jnp.bfloat16)
    if (Mp, Kp) != (M, K):
        a = jnp.pad(a, ((0, Mp - M), (0, Kp - K)))
    if (Kp, Np) != (K, N):
        b = jnp.pad(b, ((0, Kp - K), (0, Np - N)))

    out = pl.pallas_call(
        _matmul_kernel,
        out_shape=jax.ShapeDtypeStruct((Mp, Np), jnp.float32),
        grid_spec=pltpu.PrefetchScalarGridSpec(
            num_scalar_prefetch=0,
            grid=(Mp // tm, Np // tn, Kp // tk),
            in_specs=[pl.BlockSpec((tm, tk), lambda i, j, k: (i, k)),
                      pl.BlockSpec((tk, tn), lambda i, j, k: (k, j))],
            out_specs=pl.BlockSpec((tm, tn), lambda i, j, k: (i, j))),
        compiler_params=pltpu.CompilerParams(
            dimension_semantics=("parallel", "parallel", "arbitrary")),
    )(a, b)
    if (Mp, Np) != (M, N):
        out = out[:M, :N]
    return out


# --------------------------------------------------------------------------
# fused BatchNorm (single pallas_call, 2-phase grid) + residual add / ReLU
# --------------------------------------------------------------------------
def _bn_kernel(x_ref, o_ref, stat_ref, *, count, eps, relu):
    ph = pl.program_id(0)
    i = pl.program_id(1)

    @pl.when(ph == 0)
    def _stats():
        @pl.when(i == 0)
        def _():
            stat_ref[...] = jnp.zeros_like(stat_ref)

        x = x_ref[...].astype(jnp.float32)
        stat_ref[0:1, :] += jnp.sum(x, axis=0, keepdims=True)
        stat_ref[1:2, :] += jnp.sum(x * x, axis=0, keepdims=True)

        @pl.when(i == pl.num_programs(1) - 1)
        def _():
            inv = 1.0 / count
            mean = stat_ref[0:1, :] * inv
            var = jnp.maximum(stat_ref[1:2, :] * inv - mean * mean, 0.0)
            stat_ref[2:3, :] = mean
            stat_ref[3:4, :] = jax.lax.rsqrt(var + eps)

    @pl.when(ph == 1)
    def _apply():
        y = (x_ref[...].astype(jnp.float32) - stat_ref[2:3, :]) * stat_ref[3:4, :]
        if relu:
            y = jnp.maximum(y, 0.0)
        o_ref[...] = y.astype(o_ref.dtype)


def _bn_res_kernel(x_ref, r_ref, o_ref, stat_ref, *, count, eps, relu):
    ph = pl.program_id(0)
    i = pl.program_id(1)

    @pl.when(ph == 0)
    def _stats():
        @pl.when(i == 0)
        def _():
            stat_ref[...] = jnp.zeros_like(stat_ref)

        x = x_ref[...].astype(jnp.float32)
        stat_ref[0:1, :] += jnp.sum(x, axis=0, keepdims=True)
        stat_ref[1:2, :] += jnp.sum(x * x, axis=0, keepdims=True)

        @pl.when(i == pl.num_programs(1) - 1)
        def _():
            inv = 1.0 / count
            mean = stat_ref[0:1, :] * inv
            var = jnp.maximum(stat_ref[1:2, :] * inv - mean * mean, 0.0)
            stat_ref[2:3, :] = mean
            stat_ref[3:4, :] = jax.lax.rsqrt(var + eps)

    @pl.when(ph == 1)
    def _apply():
        y = (x_ref[...].astype(jnp.float32) - stat_ref[2:3, :]) * stat_ref[3:4, :]
        y = y + r_ref[...].astype(jnp.float32)
        if relu:
            y = jnp.maximum(y, 0.0)
        o_ref[...] = y.astype(o_ref.dtype)


@functools.partial(jax.jit, static_argnames=("relu", "out_dtype"))
def bn_act(x, residual=None, *, relu=True, out_dtype=jnp.bfloat16):
    """Training-mode BatchNorm2d (gamma=1, beta=0) + optional residual + ReLU.

    x: NHWC (any float dtype).  Returns NHWC in `out_dtype`.
    """
    N, H, W, C = x.shape
    M = N * H * W
    Cp = _ru(C, 128)
    trows, Mp = _pick_m_tile(M)
    # keep per-block f32 footprint modest (v7x VMEM-safe)
    while (trows > 8 and trows * Cp * 4 > (2 << 20)
           and (trows // 2) % 8 == 0 and Mp % (trows // 2) == 0):
        trows //= 2

    x2 = x.reshape(M, C)
    if (Mp, Cp) != (M, C):
        x2 = jnp.pad(x2, ((0, Mp - M), (0, Cp - C)))

    # grid = (phase, row_tile); output / residual index maps return (i*p, 0)
    # so they only stream during the apply phase (phase 0 pins block 0).
    if residual is not None:
        r2 = residual.reshape(M, C)
        if (Mp, Cp) != (M, C):
            r2 = jnp.pad(r2, ((0, Mp - M), (0, Cp - C)))
        kern = functools.partial(_bn_res_kernel, count=float(M), eps=1e-5,
                                 relu=relu)
        ins = (x2, r2)
        in_specs = [pl.BlockSpec((trows, Cp), lambda p, i: (i, 0)),
                    pl.BlockSpec((trows, Cp), lambda p, i: (i * p, 0))]
    else:
        kern = functools.partial(_bn_kernel, count=float(M), eps=1e-5,
                                 relu=relu)
        ins = (x2,)
        in_specs = [pl.BlockSpec((trows, Cp), lambda p, i: (i, 0))]

    y = pl.pallas_call(
        kern,
        out_shape=jax.ShapeDtypeStruct((Mp, Cp), out_dtype),
        grid_spec=pltpu.PrefetchScalarGridSpec(
            num_scalar_prefetch=0,
            grid=(2, Mp // trows),
            in_specs=in_specs,
            out_specs=pl.BlockSpec((trows, Cp), lambda p, i: (i * p, 0)),
            scratch_shapes=[pltpu.VMEM((8, Cp), jnp.float32)]),
        compiler_params=pltpu.CompilerParams(
            dimension_semantics=("arbitrary", "arbitrary")),
    )(*ins)
    return y[:M, :C].reshape(N, H, W, C)


# --------------------------------------------------------------------------
# channel softmax (row-tiled)
# --------------------------------------------------------------------------
def _softmax_kernel(x_ref, o_ref):
    x = x_ref[...]
    m = jnp.max(x, axis=-1, keepdims=True)
    e = jnp.exp(x - m)
    o_ref[...] = e / jnp.sum(e, axis=-1, keepdims=True)


@jax.jit
def channel_softmax(x):
    N, H, W, C = x.shape
    M = N * H * W
    Cp = _ru(C, 128)
    trows, Mp = _pick_m_tile(M)
    xp = jnp.full((Mp, Cp), -1e30, jnp.float32).at[:M, :C].set(
        x.reshape(M, C).astype(jnp.float32))
    out = pl.pallas_call(
        _softmax_kernel,
        out_shape=jax.ShapeDtypeStruct((Mp, Cp), jnp.float32),
        grid_spec=pltpu.PrefetchScalarGridSpec(
            num_scalar_prefetch=0,
            grid=(Mp // trows,),
            in_specs=[pl.BlockSpec((trows, Cp), lambda i: (i, 0))],
            out_specs=pl.BlockSpec((trows, Cp), lambda i: (i, 0))),
        compiler_params=pltpu.CompilerParams(
            dimension_semantics=("parallel",)),
    )(xp)
    return out[:M, :C].reshape(N, H, W, C)


# --------------------------------------------------------------------------
# Conv / ConvTranspose built on the Pallas GEMM
# --------------------------------------------------------------------------
def _extract_patches(x, kh, kw, stride, padding, dilation):
    N, H, W, C = x.shape
    xp = jnp.pad(x, ((0, 0), (padding, padding), (padding, padding), (0, 0)))
    Hp, Wp = H + 2 * padding, W + 2 * padding
    oh = (Hp - dilation * (kh - 1) - 1) // stride + 1
    ow = (Wp - dilation * (kw - 1) - 1) // stride + 1
    cols = []
    for i in range(kh):
        for j in range(kw):
            hs, ws = i * dilation, j * dilation
            cols.append(xp[:, hs:hs + (oh - 1) * stride + 1:stride,
                              ws:ws + (ow - 1) * stride + 1:stride, :])
    return jnp.concatenate(cols, axis=-1), oh, ow


@functools.partial(jax.jit, static_argnames=("k", "cout", "stride", "padding",
                                             "dilation", "use_bias"))
def _conv2d_impl(x, wm, b, *, k, cout, stride, padding, dilation, use_bias):
    B, _, _, cin = x.shape
    xb = x.astype(jnp.bfloat16)
    if k == 1 and padding == 0 and dilation == 1:
        if stride != 1:
            xb = xb[:, ::stride, ::stride, :]
        oh, ow = xb.shape[1], xb.shape[2]
        A = xb.reshape(B * oh * ow, cin)
    else:
        patches, oh, ow = _extract_patches(xb, k, k, stride, padding, dilation)
        A = patches.reshape(B * oh * ow, k * k * cin)
    Kp = wm.shape[0]                        # weight pre-padded to 128 multiple
    if A.shape[1] != Kp:
        A = jnp.pad(A, ((0, 0), (0, Kp - A.shape[1])))
    y = pallas_matmul(A, wm)[:, :cout]      # (M, cout) f32
    if use_bias:
        y = y + b                            # tiny 1x1 head biases only
    return y.reshape(B, oh, ow, cout)


def conv2d(x, p, stride=1, padding=0, dilation=1, use_bias=False):
    return _conv2d_impl(x, p["wm"], p["b"] if use_bias else None,
                        k=p["k"], cout=p["cout"], stride=stride,
                        padding=padding, dilation=dilation, use_bias=use_bias)


@functools.partial(jax.jit, static_argnames=("k", "s", "cout"))
def _convT_impl(x, wm, *, k, s, cout):
    """ConvTranspose2d (padding=0, bias=False) via phase/tap decomposition:
    one GEMM over input pixels against the (cin, 2s, 2s, cout) packed kernel,
    then 4 shifted adds (k <= 2*s for every transpose in this model)."""
    B, H, W, C = x.shape
    A = x.reshape(B * H * W, C).astype(jnp.bfloat16)
    Kp = wm.shape[0]
    if C != Kp:
        A = jnp.pad(A, ((0, 0), (0, Kp - C)))
    y = pallas_matmul(A, wm)[:, :4 * s * s * cout]   # (B*H*W, 4*s*s*cout)
    Y = y.reshape(B, H, W, 2, s, 2, s, cout)         # (n,iy,ix,by,py,bx,px,c)
    out = jnp.zeros((B, s * (H + 1), s * (W + 1), cout), jnp.float32)
    for by in range(2):
        for bx in range(2):
            D = jnp.transpose(Y[:, :, :, by, :, bx, :, :],
                              (0, 1, 3, 2, 4, 5)).reshape(B, s * H, s * W, cout)
            out = out.at[:, s * by:s * by + s * H,
                            s * bx:s * bx + s * W, :].add(D)
    OH = (H - 1) * s + k
    OW = (W - 1) * s + k
    return out[:, :OH, :OW, :]


def conv_transpose2d(x, p):
    return _convT_impl(x, p["wm"], k=p["k"], s=p["s"], cout=p["cout"])


@jax.jit
def maxpool_3x3_s2_p1(x):
    # TODO(synk): max-pool kept as JAX glue (tiny vs. the conv GEMMs).
    N, H, W, C = x.shape
    xp = jnp.pad(x, ((0, 0), (1, 1), (1, 1), (0, 0)),
                 constant_values=float("-inf"))
    oh = (H + 2 - 3) // 2 + 1
    ow = (W + 2 - 3) // 2 + 1
    vals = []
    for i in range(3):
        for j in range(3):
            vals.append(xp[:, i:i + (oh - 1) * 2 + 1:2,
                              j:j + (ow - 1) * 2 + 1:2, :])
    return jnp.max(jnp.stack(vals, axis=0), axis=0)


def _resize_matrix(n_in, n_out):
    if n_in == n_out:
        return np.eye(n_out, dtype=np.float32)
    src = np.arange(n_out, dtype=np.float64) * (n_in - 1) / (n_out - 1)
    i0 = np.clip(np.floor(src).astype(np.int64), 0, n_in - 2)
    w = (src - i0).astype(np.float32)
    m = np.zeros((n_out, n_in), dtype=np.float32)
    m[np.arange(n_out), i0] += 1.0 - w
    m[np.arange(n_out), i0 + 1] += w
    return m


def bilinear_resize(x, oh, ow):
    # TODO(synk): align_corners bilinear on 2-channel maps kept as tiny einsum.
    N, H, W, C = x.shape
    mh = jnp.asarray(_resize_matrix(H, oh))
    mw = jnp.asarray(_resize_matrix(W, ow))
    y = jnp.einsum("oh,nhwc->nowc", mh, x)
    y = jnp.einsum("pw,nhwc->nhpc", mw, y)
    return y


def _cat(xs):
    return jnp.concatenate([v.astype(jnp.bfloat16) for v in xs], axis=-1)


# --------------------------------------------------------------------------
# Deterministic parameter construction (mirrors the PyTorch __init__).
# Pure NumPy init; GEMM-ready, 128-aligned bf16 weight matrices packed once.
# --------------------------------------------------------------------------
class Init:
    def __init__(self, seed):
        self.rng = np.random.default_rng(seed)

    def conv(self, cin, cout, k, bias=True):
        fan_in = cin * k * k
        w = (self.rng.standard_normal((cout, cin, k, k), dtype=np.float32)
             * np.float32(np.sqrt(2.0 / fan_in)))
        wm = np.transpose(w, (2, 3, 1, 0)).reshape(k * k * cin, cout)
        wmp = np.zeros((_ru(k * k * cin, 128), _ru(cout, 128)), np.float32)
        wmp[:k * k * cin, :cout] = wm
        p = {"wm": jnp.asarray(wmp, dtype=jnp.bfloat16), "b": None,
             "k": k, "cout": cout}
        if bias:
            bound = 1.0 / np.sqrt(fan_in)
            p["b"] = jnp.asarray(
                self.rng.uniform(-bound, bound, (cout,)).astype(np.float32))
        return p

    def convT(self, cin, cout, k, s):
        fan_in = cout * k * k
        w = (self.rng.standard_normal((cin, cout, k, k), dtype=np.float32)
             * np.float32(np.sqrt(2.0 / fan_in)))
        assert k <= 2 * s
        wp = np.zeros((cin, 2 * s, 2 * s, cout), np.float32)
        wp[:, :k, :k, :] = np.transpose(w, (0, 2, 3, 1))
        wm = wp.reshape(cin, 4 * s * s * cout)
        wmp = np.zeros((_ru(cin, 128), _ru(wm.shape[1], 128)), np.float32)
        wmp[:cin, :wm.shape[1]] = wm
        return {"wm": jnp.asarray(wmp, dtype=jnp.bfloat16),
                "k": k, "s": s, "cout": cout}


def make_bottleneck(init, inplanes, planes, stride=1, downsample=False,
                    expansion=4, dilation=1):
    return {
        "c1": init.conv(inplanes, planes, 1, bias=False),
        "c2": init.conv(planes, planes, 3, bias=False),
        "c3": init.conv(planes, planes * expansion, 1, bias=False),
        "ds": (init.conv(inplanes, planes * expansion, 1, bias=False)
               if downsample else None),
        "stride": stride,
        "dilation": dilation,
    }


def run_bottleneck(x, p):
    pad = 2 if p["dilation"] == 2 else 1
    out = bn_act(conv2d(x, p["c1"]), relu=True)
    out = bn_act(conv2d(out, p["c2"], stride=p["stride"], padding=pad,
                        dilation=p["dilation"]), relu=True)
    out3 = conv2d(out, p["c3"])
    if p["ds"] is not None:
        residual = bn_act(conv2d(x, p["ds"], stride=p["stride"]), relu=False)
    else:
        residual = x
    # BN + residual add + ReLU fused into one pass
    return bn_act(out3, residual=residual, relu=True)


def make_layer(init, inplanes, planes, blocks, stride=1, dilation=1):
    ds = (stride != 1) or (inplanes != planes * 4)
    layers = [make_bottleneck(init, inplanes, planes, stride, ds, 4, dilation)]
    for _ in range(1, blocks):
        layers.append(make_bottleneck(init, planes * 4, planes, 1, False, 4,
                                      dilation))
    return layers


def run_layer(x, layers):
    for p in layers:
        x = run_bottleneck(x, p)
    return x


def make_stage(init, cin, dims, k, bias, out_ch=None):
    dl = [cin] + dims
    layers = [init.conv(dl[i], dl[i + 1], k, bias=bias)
              for i in range(len(dims))]
    out = init.conv(dims[-1], out_ch, 1, bias=True) if out_ch else None
    return {"layers": layers, "k": k, "out": out}


def run_stage(x, st):
    pad = (st["k"] - 1) // 2
    for p in st["layers"]:
        # conv bias (if any) cancels exactly in the training-mode BN
        x = bn_act(conv2d(x, p, padding=pad), relu=True)
    if st["out"] is not None:
        x = conv2d(x, st["out"], use_bias=True)
    return x


def make_up(init, cin, cmid, kt, st, pre=True):
    return {"pre": init.conv(cin, cmid, 1, bias=False) if pre else None,
            "ct": init.convT(cmid, cmid, kt, st)}


def run_up(x, p):
    if p["pre"] is not None:
        x = bn_act(conv2d(x, p["pre"]), relu=True)
    return bn_act(conv_transpose2d(x, p["ct"]), relu=True)


def build_params(seed=0):
    init = Init(seed)
    P = {}
    P["conv1"] = init.conv(3, 64, 7, bias=True)
    P["layer1"] = make_layer(init, 64, 64, 3)
    P["layer2"] = make_layer(init, 256, 128, 4, stride=2)
    P["layer3"] = make_layer(init, 512, 256, 6, stride=2)
    P["layer4"] = make_layer(init, 1024, 512, 3, stride=1, dilation=2)
    P["conv1_b"] = make_stage(init, 3, [8, 4, 16], 3, True)
    P["conv2_b"] = init.conv(3, 16, 3, bias=True)
    P["soft_boundary"] = make_stage(init, 16, [8, 8, 8, 8], 3, True, out_ch=5)
    P["res1_up"] = make_up(init, 64, 2, 4, 2)
    P["res2_up"] = make_up(init, 256, 2, 7, 4)
    P["res3_up"] = make_up(init, 512, 2, 16, 8)
    P["res4_up"] = make_up(init, 1024, 2, 32, 16)
    P["res5_up"] = make_up(init, 2048, 2, 32, 16)
    P["conv6"] = make_stage(init, 2048, [256, 256], 3, False)
    P["depth_res5c_up1"] = make_up(init, 256, 16, 7, 4)
    P["depth_res5c_up2"] = make_up(init, 16, 16, 7, 4, pre=False)
    P["normal_res5c_up1"] = make_up(init, 256, 16, 7, 4)
    P["normal_res5c_up2"] = make_up(init, 16, 16, 7, 4, pre=False)
    P["unet3a_up"] = make_up(init, 256, 256, 7, 4, pre=False)
    P["unet3a"] = make_bottleneck(init, 512, 128, 1, True, 4)
    P["unet3b"] = make_bottleneck(init, 512, 8, 1, True, 2)
    P["unet1a_up"] = make_up(init, 16, 16, 7, 4, pre=False)
    P["reflectance_res3_up1"] = make_up(init, 512, 512, 4, 2)
    P["reflectance_conv7"] = make_stage(init, 832, [256, 256], 3, False)
    P["reflectance_res123_up1"] = make_up(init, 256, 16, 4, 2)
    P["reflectance_res123_up2"] = make_up(init, 16, 16, 4, 2, pre=False)
    P["reflectance_unet3a_up_2"] = make_up(init, 256, 256, 4, 2, pre=False)
    P["reflectance_unet3a_2"] = make_bottleneck(init, 256, 128, 1, True, 4)
    P["reflectance_unet3b_2"] = make_bottleneck(init, 512, 8, 1, True, 2)
    P["reflectance_unet1a_up_2"] = make_up(init, 16, 16, 4, 2, pre=False)
    P["reflectance_res5"] = make_up(init, 2048, 256, 7, 4)
    P["reflectance_weight"] = make_stage(init, 256, [256, 256], 3, False)
    P["illumination_res3_up1"] = make_up(init, 512, 512, 4, 2)
    P["illumination_res5"] = make_up(init, 2048, 256, 7, 4)
    P["illumination_weight"] = make_stage(init, 256, [256, 256], 3, False)
    P["illumination_conv7"] = make_stage(init, 832, [256, 256], 3, False)
    P["illumination_res123_up1"] = make_up(init, 256, 16, 4, 2)
    P["illumination_res123_up2"] = make_up(init, 16, 16, 4, 2, pre=False)
    P["illumination_unet3a_up_2"] = make_up(init, 256, 256, 4, 2, pre=False)
    P["illumination_unet3a_2"] = make_bottleneck(init, 256, 128, 1, True, 4)
    P["illumination_unet3b_2"] = make_bottleneck(init, 512, 8, 1, True, 2)
    P["illumination_unet1a_up_2"] = make_up(init, 16, 16, 4, 2, pre=False)
    P["conv10_depth"] = make_stage(init, 42, [1, 1], 1, True, out_ch=1)
    P["conv10_normal"] = make_stage(init, 42, [1, 1], 1, True, out_ch=1)
    P["conv10_reflectance"] = make_stage(init, 38, [38], 3, True, out_ch=1)
    P["conv10_illumination"] = make_stage(init, 38, [38], 3, True, out_ch=1)
    P["conv10_edge"] = [init.conv(4, 4, 3, True), init.conv(4, 1, 1, True),
                        init.conv(1, 1, 1, True), init.conv(1, 1, 1, True)]
    return P


# --------------------------------------------------------------------------
# Full forward pass (mirrors RIND_Edge.forward)
# --------------------------------------------------------------------------
def rind_edge_forward(P, x_nchw):
    x = jnp.transpose(x_nchw, (0, 2, 3, 1)).astype(jnp.float32)  # NHWC
    H, W = x.shape[1], x.shape[2]

    # ResNet-50 backbone (conv1 bias cancels in the following BN)
    xf_1_1 = bn_act(conv2d(x, P["conv1"], stride=2, padding=3), relu=True)
    xf_1 = maxpool_3x3_s2_p1(xf_1_1)
    xf_2 = run_layer(xf_1, P["layer1"])
    xf_3 = run_layer(xf_2, P["layer2"])
    xf_4 = run_layer(xf_3, P["layer3"])
    res5 = run_layer(xf_4, P["layer4"])

    h1, w1 = xf_1_1.shape[1], xf_1_1.shape[2]
    h2, w2 = xf_2.shape[1], xf_2.shape[2]

    # side branches + bilinear resize to input resolution
    res1_c = bilinear_resize(run_up(xf_1_1, P["res1_up"]), H, W)
    res2_c = bilinear_resize(run_up(xf_2, P["res2_up"]), H, W)
    res3_c = bilinear_resize(run_up(xf_3, P["res3_up"]), H, W)
    res4_c = bilinear_resize(run_up(xf_4, P["res4_up"]), H, W)
    res5_c = bilinear_resize(run_up(res5, P["res5_up"]), H, W)

    # boundary branch
    xf_1_b = run_stage(x, P["conv1_b"])
    xf_2_b = bn_act(conv2d(x, P["conv2_b"], padding=1), relu=True)
    unet1 = run_stage(xf_1_b + xf_2_b, P["soft_boundary"])
    boundary_soft = channel_softmax(unet1)

    # depth / normal branch
    xf_6 = run_stage(res5, P["conv6"])
    d1 = run_up(xf_6, P["depth_res5c_up1"])[:, 3:3 + h2, 3:3 + w2, :]
    depth_crop2 = run_up(d1, P["depth_res5c_up2"])[:, 3:3 + H, 3:3 + W, :]
    n1 = run_up(xf_6, P["normal_res5c_up1"])[:, 3:3 + h2, 3:3 + w2, :]
    normal_crop2 = run_up(n1, P["normal_res5c_up2"])[:, 3:3 + H, 3:3 + W, :]

    unet3a_up_crop = run_up(xf_6, P["unet3a_up"])[:, 3:3 + h2, 3:3 + w2, :]
    xf_concat1 = _cat([unet3a_up_crop, xf_2])
    unet3a = run_bottleneck(xf_concat1, P["unet3a"])
    unet3b = run_bottleneck(unet3a, P["unet3b"])
    unet1a_up_crop = run_up(unet3b, P["unet1a_up"])[:, 1:1 + H, 1:1 + W, :]

    # reflectance branch
    r_res3c = run_up(xf_3, P["reflectance_res3_up1"])[:, 2:2 + h2, 2:2 + w2, :]
    r_res123 = _cat([xf_1, xf_2, r_res3c])
    r_xf7 = run_stage(r_res123, P["reflectance_conv7"])
    r_res5c = run_up(res5, P["reflectance_res5"])[:, 3:3 + h2, 3:3 + w2, :]
    r_xf7 = r_xf7 * run_stage(r_res5c, P["reflectance_weight"])
    r_up1 = run_up(r_xf7, P["reflectance_res123_up1"])[:, 2:2 + h1, 2:2 + w1, :]
    r_up2c = run_up(r_up1, P["reflectance_res123_up2"])[:, 2:2 + H, 2:2 + W, :]
    r_u3up = run_up(r_xf7, P["reflectance_unet3a_up_2"])[:, 2:2 + h1, 2:2 + w1, :]
    r_u3a = run_bottleneck(r_u3up, P["reflectance_unet3a_2"])
    r_u3b = run_bottleneck(r_u3a, P["reflectance_unet3b_2"])
    r_u1c = run_up(r_u3b, P["reflectance_unet1a_up_2"])[:, 1:1 + H, 1:1 + W, :]

    # illumination branch
    i_res3c = run_up(xf_3, P["illumination_res3_up1"])[:, 2:2 + h2, 2:2 + w2, :]
    i_res123 = _cat([xf_1, xf_2, i_res3c])
    i_xf7 = run_stage(i_res123, P["illumination_conv7"])
    i_res5c = run_up(res5, P["illumination_res5"])[:, 3:3 + h2, 3:3 + w2, :]
    i_xf7 = i_xf7 * run_stage(i_res5c, P["illumination_weight"])
    i_up1 = run_up(i_xf7, P["illumination_res123_up1"])[:, 2:2 + h1, 2:2 + w1, :]
    i_up2c = run_up(i_up1, P["illumination_res123_up2"])[:, 2:2 + H, 2:2 + W, :]
    i_u3up = run_up(i_xf7, P["illumination_unet3a_up_2"])[:, 2:2 + h1, 2:2 + w1, :]
    i_u3a = run_bottleneck(i_u3up, P["illumination_unet3a_2"])
    i_u3b = run_bottleneck(i_u3a, P["illumination_unet3b_2"])
    i_u1c = run_up(i_u3b, P["illumination_unet1a_up_2"])[:, 1:1 + H, 1:1 + W, :]

    # heads
    cat_d = _cat([res1_c, res2_c, res3_c, res4_c, res5_c,
                  depth_crop2, unet1a_up_crop])
    cat_n = _cat([res1_c, res2_c, res3_c, res4_c, res5_c,
                  normal_crop2, unet1a_up_crop])
    cat_r = _cat([res1_c, res2_c, res3_c, r_up2c, r_u1c])
    cat_i = _cat([res1_c, res2_c, res3_c, i_up2c, i_u1c])

    out_depth = run_stage(cat_d, P["conv10_depth"])
    out_normal = run_stage(cat_n, P["conv10_normal"])
    out_reflectance = run_stage(cat_r, P["conv10_reflectance"])
    out_illumination = run_stage(cat_i, P["conv10_illumination"])

    out_depth = out_depth * (1.0 + boundary_soft[..., 1:2])
    out_normal = out_normal * (1.0 + boundary_soft[..., 2:3])
    out_reflectance = out_reflectance * (1.0 + boundary_soft[..., 3:4])
    out_illumination = out_illumination * (1.0 + boundary_soft[..., 4:5])

    edge = _cat([out_depth, out_normal, out_reflectance, out_illumination])
    e0, e1, e2, e3 = P["conv10_edge"]
    edge = bn_act(conv2d(edge, e0, padding=1), relu=True)
    edge = bn_act(conv2d(edge, e1), relu=True)
    edge = bn_act(conv2d(edge, e2), relu=True)
    edge = conv2d(edge, e3, use_bias=True)
    edge = jax.nn.sigmoid(edge)
    return jnp.transpose(edge, (0, 3, 1, 2)).astype(jnp.float32)  # NCHW


if __name__ == "__main__":
    params = build_params(seed=0)
    x = jax.random.normal(jax.random.PRNGKey(0), (2, 3, 16, 16), jnp.float32)
    out = rind_edge_forward(params, x)
    out = jax.block_until_ready(out)
    assert out.shape == (2, 1, 16, 16), out.shape
    assert bool(jnp.all(jnp.isfinite(out)))
    print("KERNEL_OK")
</pallas_src>

<mosaic_0001>
module attributes {stable_mosaic.version = 11 : i64} {
  func.func @_matmul_kernel(%arg0: i32, %arg1: i32, %arg2: i32, %arg3: memref<128x256xbf16, #tpu.memory_space<vmem>>, %arg4: memref<256x128xbf16, #tpu.memory_space<vmem>>, %arg5: memref<128x128xf32, #tpu.memory_space<vmem>>) attributes {dimension_semantics = [#tpu.dimension_semantics<parallel>, #tpu.dimension_semantics<parallel>, #tpu.dimension_semantics<arbitrary>], iteration_bounds = array<i64: 1, 1, 1>, scalar_prefetch = 0 : i64, scratch_operands = 0 : i64, tpu.core_type = #tpu.core_type<tc>, window_params = [{transform_indices = @transform_0, window_bounds = array<i64: 128, 256>}, {transform_indices = @transform_1, window_bounds = array<i64: 256, 128>}, {transform_indices = @transform_2, window_bounds = array<i64: 128, 128>}]} {
    %c0_i32 = arith.constant 0 : i32
    %0 = arith.cmpi eq, %arg2, %c0_i32 : i32
    %1 = arith.extui %0 : i1 to i32
    %c0_i32_0 = arith.constant 0 : i32
    %2 = arith.cmpi ne, %1, %c0_i32_0 : i32
    scf.if %2 {
      %cst_8 = arith.constant 0.000000e+00 : f32
      %9 = vector.broadcast %cst_8 : f32 to vector<128x128xf32>
      %c0_9 = arith.constant 0 : index
      %c0_10 = arith.constant 0 : index
      %10 = vector.load %arg5[%c0_9, %c0_10] : memref<128x128xf32, #tpu.memory_space<vmem>>, vector<128x128xf32>
      tpu.vector_store %arg5[%c0_9, %c0_10], %9 {strides = array<i32>} : memref<128x128xf32, #tpu.memory_space<vmem>>, vector<128x128xf32>,
    } else {
    }
    %c0 = arith.constant 0 : index
    %c0_1 = arith.constant 0 : index
    %3 = vector.load %arg5[%c0, %c0_1] : memref<128x128xf32, #tpu.memory_space<vmem>>, vector<128x128xf32>
    %c0_2 = arith.constant 0 : index
    %c0_3 = arith.constant 0 : index
    %4 = vector.load %arg3[%c0_2, %c0_3] : memref<128x256xbf16, #tpu.memory_space<vmem>>, vector<128x256xbf16>
    %c0_4 = arith.constant 0 : index
    %c0_5 = arith.constant 0 : index
    %5 = vector.load %arg4[%c0_4, %c0_5] : memref<256x128xbf16, #tpu.memory_space<vmem>>, vector<256x128xbf16>
    %cst = arith.constant dense<0.000000e+00> : vector<128x128xf32>
    %6 = tpu.matmul %4, %5, %cst {dimension_numbers = #tpu.dot_dimension_numbers<[1], [0], [0], [1], [0, 0, 1, 1], [], []>} : vector<128x256xbf16>, vector<256x128xbf16>, vector<128x128xf32> -> vector<128x128xf32>
    %7 = arith.addf %3, %6 : vector<128x128xf32>
    %c0_6 = arith.constant 0 : index
    %c0_7 = arith.constant 0 : index
    %8 = vector.load %arg5[%c0_6, %c0_7] : memref<128x128xf32, #tpu.memory_space<vmem>>, vector<128x128xf32>
    tpu.vector_store %arg5[%c0_6, %c0_7], %7 {strides = array<i32>} : memref<128x128xf32, #tpu.memory_space<vmem>>, vector<128x128xf32>,
    return
  }
  func.func @transform_0(%arg0: i32, %arg1: i32, %arg2: i32) -> (i32, i32) {
    %c0_i32 = arith.constant 0 : i32
    return %arg0, %arg2 : i32, i32
  }
  func.func @transform_1(%arg0: i32, %arg1: i32, %arg2: i32) -> (i32, i32) {
    %c0_i32 = arith.constant 0 : i32
    return %arg2, %arg1 : i32, i32
  }
  func.func @transform_2(%arg0: i32, %arg1: i32, %arg2: i32) -> (i32, i32) {
    %c0_i32 = arith.constant 0 : i32
    return %arg0, %arg1 : i32, i32
  }
}

</mosaic_0001>

<llo_original>
// kernel: _conv2d_impl.1
$region0: #{_conv2d_impl.1}
  #allocation0 [shape = 'u32[]', space=smem, size = 0x4, offset = 0x4, fixed_abs, tag = 'smem constant byte address 0x4 - core index']
  #allocation1 [shape = 'u32[144,128]{1,0:T(1,128)}', space=vmem, size = 0x12000, scoped, tag = 'internal scratch']
  %s0 = inlined_call_operand.vmem [shape: bf16[128,256], index: 0, kind: input, shape index: {}]
  %s1 = inlined_call_operand.vmem [shape: bf16[256,128], index: 1, kind: input, shape index: {}]
  %s2 = inlined_call_operand.hbm [shape: f32[128,128], index: 2, kind: output, shape index: {}]
  %s3 = sld [smem:[#allocation0]]
  $region22: #{_conv2d_impl.1} parent=0
    _
  %s5 = ssub.s32 1, %s3
  %s6 = scalar_select 0, %s5, %s3
  $region1: #{_conv2d_impl.1} parent=0
    #allocation2 [shape = 'u8[65536]{0}', space=vmem, size = 0x10000, scoped, tag = 'output window, operand 0, single buffered']
    #allocation3 [shape = 's32[1]{0}', space=sflag, size = 0x4, scoped, tag = 'scoped memory for _conv2d_impl.1']
    %7 = vsyncpa [#allocation3], 0
    // Predicated region
    $region2: #{_conv2d_impl.1} parent=1 // pred_check
      _
    $region3: #{_conv2d_impl.1} parent=1 // pred_check_branch
      %9 = sbr.rel (0) target = $region5
    $region4: #{_conv2d_impl.1} parent=1 // pred_region
      _
    $region5: #{_conv2d_impl.1} parent=1 // pred_fallthru
      _
    // Predicated region
    $region6: #{_conv2d_impl.1} parent=1 // pred_check
      _
    $region7: #{_conv2d_impl.1} parent=1 // pred_check_branch
      %11 = sbr.rel (0) target = $region9
    $region8: #{_conv2d_impl.1} parent=1 // pred_region
      _
    $region9: #{_conv2d_impl.1} parent=1 // pred_fallthru
      _
    %p13 = scmp.eq.s32.totalorder 0, 0
    // Predicated region
    $region10: #{_conv2d_impl.1} parent=1 // pred_check
      %p14 = pneg %p13
    $region11: #{_conv2d_impl.1} parent=1 // pred_check_branch
      %16 = sbr.rel (%p14) target = $region13
    $region12: #{_conv2d_impl.1} parent=1 // pred_region
      %17 = vst [vmem:[#allocation2] sm:$0xff] 0.0
      %18 = vst [vmem:[#allocation2 + $0x8] sm:$0xff] 0.0
      %19 = vst [vmem:[#allocation2 + $0x10] sm:$0xff] 0.0
      %20 = vst [vmem:[#allocation2 + $0x18] sm:$0xff] 0.0
      %21 = vst [vmem:[#allocation2 + $0x20] sm:$0xff] 0.0
      %22 = vst [vmem:[#allocation2 + $0x28] sm:$0xff] 0.0
      %23 = vst [vmem:[#allocation2 + $0x30] sm:$0xff] 0.0
      %24 = vst [vmem:[#allocation2 + $0x38] sm:$0xff] 0.0
      %25 = vst [vmem:[#allocation2 + $0x40] sm:$0xff] 0.0
      %26 = vst [vmem:[#allocation2 + $0x48] sm:$0xff] 0.0
      %27 = vst [vmem:[#allocation2 + $0x50] sm:$0xff] 0.0
      %28 = vst [vmem:[#allocation2 + $0x58] sm:$0xff] 0.0
      %29 = vst [vmem:[#allocation2 + $0x60] sm:$0xff] 0.0
      %30 = vst [vmem:[#allocation2 + $0x68] sm:$0xff] 0.0
      %31 = vst [vmem:[#allocation2 + $0x70] sm:$0xff] 0.0
      %32 = vst [vmem:[#allocation2 + $0x78] sm:$0xff] 0.0
    $region13: #{_conv2d_impl.1} parent=1 // pred_fallthru
      _
    %v33 = vld [vmem:[#allocation2] sm:$0xff]
    %v34 = vld [vmem:[#allocation2 + $0x8] sm:$0xff]
    %v35 = vld [vmem:[#allocation2 + $0x10] sm:$0xff]
    %v36 = vld [vmem:[#allocation2 + $0x18] sm:$0xff]
    %v37 = vld [vmem:[#allocation2 + $0x20] sm:$0xff]
    %v38 = vld [vmem:[#allocation2 + $0x28] sm:$0xff]
    %v39 = vld [vmem:[#allocation2 + $0x30] sm:$0xff]
    %v40 = vld [vmem:[#allocation2 + $0x38] sm:$0xff]
    %v41 = vld [vmem:[#allocation2 + $0x40] sm:$0xff]
    %v42 = vld [vmem:[#allocation2 + $0x48] sm:$0xff]
    %v43 = vld [vmem:[#allocation2 + $0x50] sm:$0xff]
    %v44 = vld [vmem:[#allocation2 + $0x58] sm:$0xff]
    %v45 = vld [vmem:[#allocation2 + $0x60] sm:$0xff]
    %v46 = vld [vmem:[#allocation2 + $0x68] sm:$0xff]
    %v47 = vld [vmem:[#allocation2 + $0x70] sm:$0xff]
    %v48 = vld [vmem:[#allocation2 + $0x78] sm:$0xff]
    %v49 = vld [vmem:[%s0] sm:$0xff]
    %v50 = vld [vmem:[%s0 + $0x8] sm:$0xff]
    %v51 = vld [vmem:[%s0 + $0x10] sm:$0xff]
    %v52 = vld [vmem:[%s0 + $0x18] sm:$0xff]
    %v53 = vld [vmem:[%s0 + $0x20] sm:$0xff]
    %v54 = vld [vmem:[%s0 + $0x28] sm:$0xff]
    %v55 = vld [vmem:[%s0 + $0x30] sm:$0xff]
    %v56 = vld [vmem:[%s0 + $0x38] sm:$0xff]
    %v57 = vld [vmem:[%s0 + $0x40] sm:$0xff]
    %v58 = vld [vmem:[%s0 + $0x48] sm:$0xff]
    %v59 = vld [vmem:[%s0 + $0x50] sm:$0xff]
    %v60 = vld [vmem:[%s0 + $0x58] sm:$0xff]
    %v61 = vld [vmem:[%s0 + $0x60] sm:$0xff]
    %v62 = vld [vmem:[%s0 + $0x68] sm:$0xff]
    %v63 = vld [vmem:[%s0 + $0x70] sm:$0xff]
    %v64 = vld [vmem:[%s0 + $0x78] sm:$0xff]
    %v65 = vld [vmem:[%s1] sm:$0xf]
    %v66 = vld [vmem:[%s1 + $0x4] sm:$0xf]
    %v67 = vld [vmem:[%s1 + $0x8] sm:$0xf]
    %v68 = vld [vmem:[%s1 + $0xc] sm:$0xf]
    %v69 = vld [vmem:[%s1 + $0x10] sm:$0xf]
    %v70 = vld [vmem:[%s1 + $0x14] sm:$0xf]
    %v71 = vld [vmem:[%s1 + $0x18] sm:$0xf]
    %v72 = vld [vmem:[%s1 + $0x1c] sm:$0xf]
    %v73 = vld [vmem:[%s1 + $0x20] sm:$0xf]
    %v74 = vld [vmem:[%s1 + $0x24] sm:$0xf]
    %v75 = vld [vmem:[%s1 + $0x28] sm:$0xf]
    %v76 = vld [vmem:[%s1 + $0x2c] sm:$0xf]
    %v77 = vld [vmem:[%s1 + $0x30] sm:$0xf]
    %v78 = vld [vmem:[%s1 + $0x34] sm:$0xf]
    %v79 = vld [vmem:[%s1 + $0x38] sm:$0xf]
    %v80 = vld [vmem:[%s1 + $0x3c] sm:$0xf]
    %v81 = vld [vmem:[%s1 + $0x40] sm:$0xf]
    %v82 = vld [vmem:[%s1 + $0x44] sm:$0xf]
    %v83 = vld [vmem:[%s1 + $0x48] sm:$0xf]
    %v84 = vld [vmem:[%s1 + $0x4c] sm:$0xf]
    %v85 = vld [vmem:[%s1 + $0x50] sm:$0xf]
    %v86 = vld [vmem:[%s1 + $0x54] sm:$0xf]
    %v87 = vld [vmem:[%s1 + $0x58] sm:$0xf]
    %v88 = vld [vmem:[%s1 + $0x5c] sm:$0xf]
    %v89 = vld [vmem:[%s1 + $0x60] sm:$0xf]
    %v90 = vld [vmem:[%s1 + $0x64] sm:$0xf]
    %v91 = vld [vmem:[%s1 + $0x68] sm:$0xf]
    %v92 = vld [vmem:[%s1 + $0x6c] sm:$0xf]
    %v93 = vld [vmem:[%s1 + $0x70] sm:$0xf]
    %v94 = vld [vmem:[%s1 + $0x74] sm:$0xf]
    %v95 = vld [vmem:[%s1 + $0x78] sm:$0xf]
    %v96 = vld [vmem:[%s1 + $0x7c] sm:$0xf]
    %v113 = vunpack.c.l.b16 %v49
    %v114 = vunpack.c.h.b16 %v49
    %v115 = vunpack.c.l.b16 %v50
    %v116 = vunpack.c.h.b16 %v50
    %v117 = vunpack.c.l.b16 %v51
    %v118 = vunpack.c.h.b16 %v51
    %v119 = vunpack.c.l.b16 %v52
    %v120 = vunpack.c.h.b16 %v52
    %v121 = vunpack.c.l.b16 %v53
    %v122 = vunpack.c.h.b16 %v53
    %v123 = vunpack.c.l.b16 %v54
    %v124 = vunpack.c.h.b16 %v54
    %v125 = vunpack.c.l.b16 %v55
    %v126 = vunpack.c.h.b16 %v55
    %v127 = vunpack.c.l.b16 %v56
    %v128 = vunpack.c.h.b16 %v56
    %v129 = vunpack.c.l.b16 %v57
    %v130 = vunpack.c.h.b16 %v57
    %v131 = vunpack.c.l.b16 %v58
    %v132 = vunpack.c.h.b16 %v58
    %v133 = vunpack.c.l.b16 %v59
    %v134 = vunpack.c.h.b16 %v59
    %v135 = vunpack.c.l.b16 %v60
    %v136 = vunpack.c.h.b16 %v60
    %v137 = vunpack.c.l.b16 %v61
    %v138 = vunpack.c.h.b16 %v61
    %v139 = vunpack.c.l.b16 %v62
    %v140 = vunpack.c.h.b16 %v62
    %v141 = vunpack.c.l.b16 %v63
    %v142 = vunpack.c.h.b16 %v63
    %v143 = vunpack.c.l.b16 %v64
    %v144 = vunpack.c.h.b16 %v64
    %v145 = vpack.c.b16 %v115, %v113
    %v146 = vpack.c.b16 %v116, %v114
    %v147 = vpack.c.b16 %v119, %v117
    %v148 = vpack.c.b16 %v120, %v118
    %v149 = vpack.c.b16 %v123, %v121
    %v150 = vpack.c.b16 %v124, %v122
    %v151 = vpack.c.b16 %v127, %v125
    %v152 = vpack.c.b16 %v128, %v126
    %v153 = vpack.c.b16 %v131, %v129
    %v154 = vpack.c.b16 %v132, %v130
    %v155 = vpack.c.b16 %v135, %v133
    %v156 = vpack.c.b16 %v136, %v134
    %v157 = vpack.c.b16 %v139, %v137
    %v158 = vpack.c.b16 %v140, %v138
    %v159 = vpack.c.b16 %v143, %v141
    %v160 = vpack.c.b16 %v144, %v142
    %v209 = vunpack.c.l.b16 %v65
    %v210 = vunpack.c.l.b16 %v66
    %v211 = vunpack.c.l.b16 %v67
    %v212 = vunpack.c.l.b16 %v68
    %v213 = vunpack.c.l.b16 %v69
    %v214 = vunpack.c.l.b16 %v70
    %v215 = vunpack.c.l.b16 %v71
    %v216 = vunpack.c.l.b16 %v72
    %v217 = vunpack.c.l.b16 %v73
    %v218 = vunpack.c.l.b16 %v74
    %v219 = vunpack.c.l.b16 %v75
    %v220 = vunpack.c.l.b16 %v76
    %v221 = vunpack.c.l.b16 %v77
    %v222 = vunpack.c.l.b16 %v78
    %v223 = vunpack.c.l.b16 %v79
    %v224 = vunpack.c.l.b16 %v80
    %v225 = vunpack.c.l.b16 %v81
    %v226 = vunpack.c.l.b16 %v82
    %v227 = vunpack.c.l.b16 %v83
    %v228 = vunpack.c.l.b16 %v84
    %v229 = vunpack.c.l.b16 %v85
    %v230 = vunpack.c.l.b16 %v86
    %v231 = vunpack.c.l.b16 %v87
    %v232 = vunpack.c.l.b16 %v88
    %v233 = vunpack.c.l.b16 %v89
    %v234 = vunpack.c.l.b16 %v90
    %v235 = vunpack.c.l.b16 %v91
    %v236 = vunpack.c.l.b16 %v92
    %v237 = vunpack.c.l.b16 %v93
    %v238 = vunpack.c.l.b16 %v94
    %v239 = vunpack.c.l.b16 %v95
    %v240 = vunpack.c.l.b16 %v96
    %v241 = vpack.c.b16 %v210, %v209
    %v242 = vpack.c.b16 %v212, %v211
    %v243 = vpack.c.b16 %v214, %v213
    %v244 = vpack.c.b16 %v216, %v215
    %v245 = vpack.c.b16 %v218, %v217
    %v246 = vpack.c.b16 %v220, %v219
    %v247 = vpack.c.b16 %v222, %v221
    %v248 = vpack.c.b16 %v224, %v223
    %v249 = vpack.c.b16 %v226, %v225
    %v250 = vpack.c.b16 %v228, %v227
    %v251 = vpack.c.b16 %v230, %v229
    %v252 = vpack.c.b16 %v232, %v231
    %v253 = vpack.c.b16 %v234, %v233
    %v254 = vpack.c.b16 %v236, %v235
    %v255 = vpack.c.b16 %v238, %v237
    %v256 = vpack.c.b16 %v240, %v239
    %273 = vmatprep.subr.bf16.mxu0 0
    %274 = vmatpush1.bf16.msra.mxu0 %v241
    %275 = vmatprep.subr.bf16.mxu0 0
    %276 = vmatpush1.bf16.msra.mxu0 %v242
    %277 = vmatprep.subr.bf16.mxu0 0
    %278 = vmatpush1.bf16.msra.mxu0 %v243
    %279 = vmatprep.subr.bf16.mxu0 0
    %280 = vmatpush1.bf16.msra.mxu0 %v244
    %281 = vmatprep.subr.bf16.mxu0 0
    %282 = vmatpush1.bf16.msra.mxu0 %v245
    %283 = vmatprep.subr.bf16.mxu0 0
    %284 = vmatpush1.bf16.msra.mxu0 %v246
    %285 = vmatprep.subr.bf16.mxu0 0
    %286 = vmatpush1.bf16.msra.mxu0 %v247
    %287 = vmatprep.subr.bf16.mxu0 0
    %288 = vmatpush1.bf16.msra.mxu0 %v248
    %289 = vmatprep.subr.bf16.mxu0 0
    %290 = vmatpush1.bf16.msra.mxu0 %v249
    %291 = vmatprep.subr.bf16.mxu0 0
    %292 = vmatpush1.bf16.msra.mxu0 %v250
    %293 = vmatprep.subr.bf16.mxu0 0
    %294 = vmatpush1.bf16.msra.mxu0 %v251
    %295 = vmatprep.subr.bf16.mxu0 0
    %296 = vmatpush1.bf16.msra.mxu0 %v252
    %297 = vmatprep.subr.bf16.mxu0 0
    %298 = vmatpush1.bf16.msra.mxu0 %v253
    %299 = vmatprep.subr.bf16.mxu0 0
    %300 = vmatpush1.bf16.msra.mxu0 %v254
    %301 = vmatprep.subr.bf16.mxu0 0
    %302 = vmatpush1.bf16.msra.mxu0 %v255
    %303 = vmatprep.subr.bf16.mxu0 0
    %304 = vmatpush1.bf16.msra.mxu0 %v256
    %305 = vmatprep.mubr.bf16.mxu0 %v146
    %306 = vmatmul.mubr.bf16.gmra.mrb[0].mxu0 %v145
    %v307 = vpop.f32.mrb[0].mxu0
    %v308 = vadd.f32 0.0, %v307
    %v309 = vpop.f32.mrb[0].mxu0
    %v310 = vpop.f32.mrb[0].mxu0
    %v311 = vadd.f32 0.0, %v310
    %v312 = vpop.f32.mrb[0].mxu0
    %313 = vmatprep.mubr.bf16.mxu0 %v148
    %314 = vmatmul.mubr.bf16.gmra.mrb[0].mxu0 %v147
    %v315 = vpop.f32.mrb[0].mxu0
    %v316 = vadd.f32 0.0, %v315
    %v317 = vpop.f32.mrb[0].mxu0
    %v318 = vpop.f32.mrb[0].mxu0
    %v319 = vadd.f32 0.0, %v318
    %v320 = vpop.f32.mrb[0].mxu0
    %321 = vmatprep.mubr.bf16.mxu0 %v150
    %322 = vmatmul.mubr.bf16.gmra.mrb[0].mxu0 %v149
    %v323 = vpop.f32.mrb[0].mxu0
    %v324 = vadd.f32 0.0, %v323
    %v325 = vpop.f32.mrb[0].mxu0
    %v326 = vpop.f32.mrb[0].mxu0
    %v327 = vadd.f32 0.0, %v326
    %v328 = vpop.f32.mrb[0].mxu0
    %329 = vmatprep.mubr.bf16.mxu0 %v152
    %330 = vmatmul.mubr.bf16.gmra.mrb[0].mxu0 %v151
    %v331 = vpop.f32.mrb[0].mxu0
    %v332 = vadd.f32 0.0, %v331
    %v333 = vpop.f32.mrb[0].mxu0
    %v334 = vpop.f32.mrb[0].mxu0
    %v335 = vadd.f32 0.0, %v334
    %v336 = vpop.f32.mrb[0].mxu0
    %337 = vmatprep.mubr.bf16.mxu0 %v154
    %338 = vmatmul.mubr.bf16.gmra.mrb[0].mxu0 %v153
    %v339 = vpop.f32.mrb[0].mxu0
    %v340 = vadd.f32 0.0, %v339
    %v341 = vpop.f32.mrb[0].mxu0
    %v342 = vpop.f32.mrb[0].mxu0
    %v343 = vadd.f32 0.0, %v342
    %v344 = vpop.f32.mrb[0].mxu0
    %345 = vmatprep.mubr.bf16.mxu0 %v156
    %346 = vmatmul.mubr.bf16.gmra.mrb[0].mxu0 %v155
    %v347 = vpop.f32.mrb[0].mxu0
    %v348 = vadd.f32 0.0, %v347
    %v349 = vpop.f32.mrb[0].mxu0
    %v350 = vpop.f32.mrb[0].mxu0
    %v351 = vadd.f32 0.0, %v350
    %v352 = vpop.f32.mrb[0].mxu0
    %353 = vmatprep.mubr.bf16.mxu0 %v158
    %354 = vmatmul.mubr.bf16.gmra.mrb[0].mxu0 %v157
    %v355 = vpop.f32.mrb[0].mxu0
    %v356 = vadd.f32 0.0, %v355
    %v357 = vpop.f32.mrb[0].mxu0
    %v358 = vpop.f32.mrb[0].mxu0
    %v359 = vadd.f32 0.0, %v358
    %v360 = vpop.f32.mrb[0].mxu0
    %361 = vmatprep.mubr.bf16.mxu0 %v160
    %362 = vmatmul.mubr.bf16.gmra.mrb[0].mxu0 %v159
    %v363 = vpop.f32.mrb[0].mxu0
    %v364 = vadd.f32 0.0, %v363
    %v365 = vpop.f32.mrb[0].mxu0
    %v366 = vpop.f32.mrb[0].mxu0
    %v367 = vadd.f32 0.0, %v366
    %v368 = vpop.f32.mrb[0].mxu0
    %369 = vdwg.mxu0
    %v370 = vadd.f32 %v33, %v308
    %v371 = vadd.f32 %v34, %v311
    %v372 = vadd.f32 %v35, %v316
    %v373 = vadd.f32 %v36, %v319
    %v374 = vadd.f32 %v37, %v324
    %v375 = vadd.f32 %v38, %v327
    %v376 = vadd.f32 %v39, %v332
    %v377 = vadd.f32 %v40, %v335
    %v378 = vadd.f32 %v41, %v340
    %v379 = vadd.f32 %v42, %v343
    %v380 = vadd.f32 %v43, %v348
    %v381 = vadd.f32 %v44, %v351
    %v382 = vadd.f32 %v45, %v356
    %v383 = vadd.f32 %v46, %v359
    %v384 = vadd.f32 %v47, %v364
    %v385 = vadd.f32 %v48, %v367
    %386 = vst [vmem:[#allocation2] sm:$0xff] %v370
    %387 = vst [vmem:[#allocation2 + $0x8] sm:$0xff] %v371
    %388 = vst [vmem:[#allocation2 + $0x10] sm:$0xff] %v372
    %389 = vst [vmem:[#allocation2 + $0x18] sm:$0xff] %v373
    %390 = vst [vmem:[#allocation2 + $0x20] sm:$0xff] %v374
    %391 = vst [vmem:[#allocation2 + $0x28] sm:$0xff] %v375
    %392 = vst [vmem:[#allocation2 + $0x30] sm:$0xff] %v376
    %393 = vst [vmem:[#allocation2 + $0x38] sm:$0xff] %v377
    %394 = vst [vmem:[#allocation2 + $0x40] sm:$0xff] %v378
    %395 = vst [vmem:[#allocation2 + $0x48] sm:$0xff] %v379
    %396 = vst [vmem:[#allocation2 + $0x50] sm:$0xff] %v380
    %397 = vst [vmem:[#allocation2 + $0x58] sm:$0xff] %v381
    %398 = vst [vmem:[#allocation2 + $0x60] sm:$0xff] %v382
    %399 = vst [vmem:[#allocation2 + $0x68] sm:$0xff] %v383
    %400 = vst [vmem:[#allocation2 + $0x70] sm:$0xff] %v384
    %401 = vst [vmem:[#allocation2 + $0x78] sm:$0xff] %v385
    // Predicated region
    $region14: #{_conv2d_impl.1} parent=1 // pred_check
      _
    $region15: #{_conv2d_impl.1} parent=1 // pred_check_branch
      %403 = sbr.rel (0) target = $region17
    $region16: #{_conv2d_impl.1} parent=1 // pred_region
      %s405 = ssub.s32 2048, 2048
      %406 = vsyncadd [#allocation3], %s405
      %s407 = sshll.u32 [#allocation2], 4
      %s408 = int_to_ptr.vmem [resolvable:$true] %s407
      %413 = dma.vmem_to_hbm [thread:$0]  %s408, 2048, %s2, [#allocation3], 128, 128, 8
    $region17: #{_conv2d_impl.1} parent=1 // pred_fallthru
      _
    // Predicated region
    $region18: #{_conv2d_impl.1} parent=1 // pred_check
      _
    $region19: #{_conv2d_impl.1} parent=1 // pred_check_branch
      %415 = sbr.rel (0) target = $region21
    $region20: #{_conv2d_impl.1} parent=1 // pred_region
      %416 = dma.done [#allocation3], 2048
    $region21: #{_conv2d_impl.1} parent=1 // pred_fallthru
      _
    %417 = vsyncpa [#allocation3], 1

</llo_original>
